<compile_context>
chip_gen: v6e
topology: v6e:2x2x1
jax: 0.10.0
libtpu: 0.0.40
codegen_flags: <defaults>
</compile_context>

<pallas_src>
import functools

import jax
import jax.numpy as jnp
from jax.experimental import pallas as pl
from jax.experimental.pallas import tpu as pltpu

_LANE = 128


def _lif_zo_kernel(x_ref, z_ref, spk_ref, grad_ref, u_ref, *,
                   u_th, beta, delta, sample_num):
    # grid = (num_row_tiles, T); axis 1 (time) is sequential ("arbitrary"),
    # axis 0 (flattened B*C*H*W rows) is "parallel".
    t = pl.program_id(1)

    @pl.when(t == 0)
    def _():
        u_ref[...] = jnp.zeros_like(u_ref)

    x = x_ref[0].astype(jnp.float32)                 # (tp, 128)
    u = beta * u_ref[...] + x                        # leaky integrate (f32 carry)
    spk = (u > u_th).astype(jnp.float32)             # fire
    v_abs = jnp.abs(u - u_th)

    # LocalZO surrogate gradient: mean_s |z_s| * 1{|u-u_th| < delta*|z_s|} / (2*delta)
    # Accumulated with a static loop over the (small) sample axis: one select+add per
    # sample, no (S, tp, 128) intermediates -> low vreg pressure at large tp.
    acc = jnp.zeros_like(u)
    for s in range(sample_num):
        absz = jnp.abs(z_ref[s, 0].astype(jnp.float32))   # (tp, 128)
        acc = acc + jnp.where(v_abs < delta * absz, absz, 0.0)
    grad = acc * (1.0 / (2.0 * delta * sample_num))  # constant folded at trace time

    spk_ref[0] = spk.astype(spk_ref.dtype)
    grad_ref[0] = grad.astype(grad_ref.dtype)
    u_ref[...] = u - spk * u_th                      # reset-by-subtraction


def _plan_rows(p, row_tile_cap=512):
    """Pick (padded flat size Pp, row tile tp in 128-lane rows) for P = B*C*H*W."""
    pr = -(-p // _LANE)                  # rows of 128 lanes (ceil)
    if pr <= 8:
        # Tiny problem: a single full-extent row tile (allowed: equals full dim).
        return pr * _LANE, pr
    # Aim for >= 2 row tiles (keeps the "parallel" axis shardable across v7x's 2 TCs)
    # with tp a multiple of 8 and capped so the double-buffered working set stays
    # comfortably inside every generation's scoped-VMEM default.
    tp = min(row_tile_cap, -(-pr // 2))
    tp = max(8, (tp // 8) * 8)
    pr = -(-pr // tp) * tp               # pad row count up to a multiple of tp
    return pr * _LANE, tp


def leaky_zo_plain_forward(inputs, random_tangents, *, batch_size, u_th, beta,
                           delta=0.01, row_tile_cap=512,
                           spk_dtype=jnp.float32, grad_dtype=jnp.float32):
    """inputs: (T*B, C, H, W); random_tangents: (S, T*B, C, H, W) (any float dtype)."""
    TB, C, H, W = inputs.shape
    assert TB % batch_size == 0
    T = TB // batch_size
    S = random_tangents.shape[0]
    P = batch_size * C * H * W

    Pp, tp = _plan_rows(P, row_tile_cap)
    Pr = Pp // _LANE

    # Flatten all parallel dims; keep incoming dtypes (no wrapper-side astype pass).
    x = inputs.reshape(T, P)
    z = random_tangents.reshape(S, T, P)
    pad = Pp - P
    if pad:
        # Only the flat tail of B*C*H*W is padded (not every row's F as before), and
        # only when P % 128 != 0.  Zero-padded z lanes give absz=0 -> grad 0 there.
        # TODO(synk): replace this copy of z with an in-kernel masked tail tile.
        x = jnp.pad(x, ((0, 0), (0, pad)))
        z = jnp.pad(z, ((0, 0), (0, 0), (0, pad)))
    x = x.reshape(T, Pr, _LANE)
    z = z.reshape(S, T, Pr, _LANE)

    kernel = functools.partial(_lif_zo_kernel, u_th=u_th, beta=beta,
                               delta=delta, sample_num=S)

    spk, grad = pl.pallas_call(
        kernel,
        out_shape=(
            jax.ShapeDtypeStruct((T, Pr, _LANE), spk_dtype),
            jax.ShapeDtypeStruct((T, Pr, _LANE), grad_dtype),
        ),
        grid_spec=pltpu.PrefetchScalarGridSpec(
            num_scalar_prefetch=0,
            grid=(Pr // tp, T),
            in_specs=[
                pl.BlockSpec((1, tp, _LANE), lambda r, t: (t, r, 0)),
                pl.BlockSpec((S, 1, tp, _LANE), lambda r, t: (0, t, r, 0)),
            ],
            out_specs=[
                pl.BlockSpec((1, tp, _LANE), lambda r, t: (t, r, 0)),
                pl.BlockSpec((1, tp, _LANE), lambda r, t: (t, r, 0)),
            ],
            scratch_shapes=[pltpu.VMEM((tp, _LANE), jnp.float32)],
        ),
        compiler_params=pltpu.CompilerParams(
            dimension_semantics=("parallel", "arbitrary")),
    )(x, z)

    spk = spk.reshape(T, Pp)[:, :P].reshape(TB, C, H, W)
    grad = grad.reshape(T, Pp)[:, :P].reshape(TB, C, H, W)
    return spk, grad


# ----------------------------- pure-JAX references -----------------------------

def _reference_spikes(inputs, batch_size, u_th, beta):
    TB = inputs.shape[0]
    T = TB // batch_size
    x = inputs.reshape(T, batch_size, *inputs.shape[1:]).astype(jnp.float32)
    u = jnp.zeros_like(x[0])
    outs = []
    for t in range(T):
        u = beta * u + x[t]
        spk = (u > u_th).astype(jnp.float32)
        outs.append(spk)
        u = u - spk * u_th
    return jnp.stack(outs).reshape(inputs.shape)


def _reference_zo_grad(inputs, tangents, batch_size, u_th, beta, delta):
    TB = inputs.shape[0]
    T = TB // batch_size
    S = tangents.shape[0]
    x = inputs.reshape(T, batch_size, -1).astype(jnp.float32)
    z = tangents.reshape(S, T, batch_size, -1).astype(jnp.float32)
    u = jnp.zeros_like(x[0])
    grads = []
    for t in range(T):
        u = beta * u + x[t]
        spk = (u > u_th).astype(jnp.float32)
        absz = jnp.abs(z[:, t])
        hit = (jnp.abs(u - u_th)[None] < delta * absz).astype(jnp.float32)
        grads.append(jnp.mean(hit * absz, axis=0) / (2.0 * delta))
        u = u - spk * u_th
    return jnp.stack(grads).reshape(inputs.shape)


if __name__ == "__main__":
    # Module hyper-parameters (deterministic, synthetic).
    batch_size = 2
    u_th = 1.0
    beta = 0.5
    sample_num = 3
    delta = 0.05

    T, C, H, W = 4, 4, 8, 8

    key = jax.random.PRNGKey(0)
    k_in, k_z = jax.random.split(key)
    inputs = jax.random.normal(k_in, (T * batch_size, C, H, W), dtype=jnp.float32)
    # Sampler-provided tangents shipped as bf16 (stochastic ZO estimator tolerates it;
    # halves the dominant HBM stream).  The kernel upcasts per-tile.
    random_tangents = jax.random.normal(
        k_z, (sample_num, T * batch_size, C, H, W), dtype=jnp.bfloat16)

    spikes, zo_grad = leaky_zo_plain_forward(
        inputs, random_tangents,
        batch_size=batch_size, u_th=u_th, beta=beta, delta=delta,
        spk_dtype=jnp.float32,          # module returns float spikes
        grad_dtype=jnp.bfloat16)        # saved-for-backward surrogate: narrow writeback
    jax.block_until_ready((spikes, zo_grad))

    ref_spk = _reference_spikes(inputs, batch_size, u_th, beta)
    assert spikes.shape == inputs.shape and spikes.dtype == jnp.float32
    assert bool(jnp.allclose(spikes, ref_spk)), "spike mismatch vs reference"

    ref_grad = _reference_zo_grad(inputs, random_tangents, batch_size, u_th, beta, delta)
    assert zo_grad.shape == inputs.shape
    assert bool(jnp.allclose(zo_grad.astype(jnp.float32), ref_grad,
                             rtol=5e-2, atol=5e-2)), "ZO surrogate grad mismatch"

    print("KERNEL_OK")
</pallas_src>

<mosaic_0001>
module attributes {stable_mosaic.version = 11 : i64} {
  func.func @_lif_zo_kernel(%arg0: i32, %arg1: i32, %arg2: memref<1x4x128xf32, #tpu.memory_space<vmem>>, %arg3: memref<3x1x4x128xbf16, #tpu.memory_space<vmem>>, %arg4: memref<1x4x128xf32, #tpu.memory_space<vmem>>, %arg5: memref<1x4x128xbf16, #tpu.memory_space<vmem>>, %arg6: memref<4x128xf32, #tpu.memory_space<vmem>>) attributes {dimension_semantics = [#tpu.dimension_semantics<parallel>, #tpu.dimension_semantics<arbitrary>], iteration_bounds = array<i64: 1, 4>, scalar_prefetch = 0 : i64, scratch_operands = 1 : i64, tpu.core_type = #tpu.core_type<tc>, window_params = [{transform_indices = @transform_0, window_bounds = array<i64: 1, 4, 128>}, {transform_indices = @transform_1, window_bounds = array<i64: 3, 1, 4, 128>}, {transform_indices = @transform_2, window_bounds = array<i64: 1, 4, 128>}, {transform_indices = @transform_3, window_bounds = array<i64: 1, 4, 128>}]} {
    %c0_i32 = arith.constant 0 : i32
    %0 = arith.cmpi eq, %arg1, %c0_i32 : i32
    %1 = arith.extui %0 : i1 to i32
    %c0_i32_0 = arith.constant 0 : i32
    %2 = arith.cmpi ne, %1, %c0_i32_0 : i32
    scf.if %2 {
      %cst_34 = arith.constant 0.000000e+00 : f32
      %60 = vector.broadcast %cst_34 : f32 to vector<4x128xf32>
      %c0_35 = arith.constant 0 : index
      %c0_36 = arith.constant 0 : index
      %61 = vector.load %arg6[%c0_35, %c0_36] : memref<4x128xf32, #tpu.memory_space<vmem>>, vector<4x128xf32>
      tpu.vector_store %arg6[%c0_35, %c0_36], %60 {strides = array<i32>} : memref<4x128xf32, #tpu.memory_space<vmem>>, vector<4x128xf32>,
    } else {
    }
    %c0 = arith.constant 0 : index
    %c0_1 = arith.constant 0 : index
    %c0_2 = arith.constant 0 : index
    %3 = vector.load %arg2[%c0, %c0_1, %c0_2] : memref<1x4x128xf32, #tpu.memory_space<vmem>>, vector<1x4x128xf32>
    %4 = vector.shape_cast %3 : vector<1x4x128xf32> to vector<4x128xf32>
    %c0_3 = arith.constant 0 : index
    %c0_4 = arith.constant 0 : index
    %5 = vector.load %arg6[%c0_3, %c0_4] : memref<4x128xf32, #tpu.memory_space<vmem>>, vector<4x128xf32>
    %cst = arith.constant 5.000000e-01 : f32
    %6 = vector.broadcast %cst : f32 to vector<4x128xf32>
    %7 = arith.mulf %6, %5 : vector<4x128xf32>
    %8 = arith.addf %7, %4 : vector<4x128xf32>
    %cst_5 = arith.constant 1.000000e+00 : f32
    %9 = vector.broadcast %cst_5 : f32 to vector<4x128xf32>
    %10 = arith.cmpf ogt, %8, %9 : vector<4x128xf32>
    %11 = arith.extui %10 : vector<4x128xi1> to vector<4x128xi32>
    %12 = arith.sitofp %11 : vector<4x128xi32> to vector<4x128xf32>
    %cst_6 = arith.constant 1.000000e+00 : f32
    %13 = vector.broadcast %cst_6 : f32 to vector<4x128xf32>
    %14 = arith.subf %8, %13 : vector<4x128xf32>
    %15 = math.absf %14 : vector<4x128xf32>
    %cst_7 = arith.constant 0.000000e+00 : f32
    %16 = vector.broadcast %cst_7 : f32 to vector<4x128xf32>
    %c0_8 = arith.constant 0 : index
    %c0_9 = arith.constant 0 : index
    %c0_10 = arith.constant 0 : index
    %c0_11 = arith.constant 0 : index
    %17 = vector.load %arg3[%c0_8, %c0_9, %c0_10, %c0_11] : memref<3x1x4x128xbf16, #tpu.memory_space<vmem>>, vector<1x1x4x128xbf16>
    %18 = vector.shape_cast %17 : vector<1x1x4x128xbf16> to vector<4x128xbf16>
    %19 = arith.extf %18 : vector<4x128xbf16> to vector<4x128xf32>
    %20 = math.absf %19 : vector<4x128xf32>
    %cst_12 = arith.constant 5.000000e-02 : f32
    %21 = vector.broadcast %cst_12 : f32 to vector<4x128xf32>
    %22 = arith.mulf %21, %20 : vector<4x128xf32>
    %23 = arith.cmpf olt, %15, %22 : vector<4x128xf32>
    %cst_13 = arith.constant 0.000000e+00 : f32
    %24 = vector.broadcast %cst_13 : f32 to vector<4x128xf32>
    %25 = arith.select %23, %20, %24 : vector<4x128xi1>, vector<4x128xf32>
    %26 = arith.addf %16, %25 : vector<4x128xf32>
    %c1 = arith.constant 1 : index
    %c0_14 = arith.constant 0 : index
    %c0_15 = arith.constant 0 : index
    %c0_16 = arith.constant 0 : index
    %27 = vector.load %arg3[%c1, %c0_14, %c0_15, %c0_16] : memref<3x1x4x128xbf16, #tpu.memory_space<vmem>>, vector<1x1x4x128xbf16>
    %28 = vector.shape_cast %27 : vector<1x1x4x128xbf16> to vector<4x128xbf16>
    %29 = arith.extf %28 : vector<4x128xbf16> to vector<4x128xf32>
    %30 = math.absf %29 : vector<4x128xf32>
    %cst_17 = arith.constant 5.000000e-02 : f32
    %31 = vector.broadcast %cst_17 : f32 to vector<4x128xf32>
    %32 = arith.mulf %31, %30 : vector<4x128xf32>
    %33 = arith.cmpf olt, %15, %32 : vector<4x128xf32>
    %cst_18 = arith.constant 0.000000e+00 : f32
    %34 = vector.broadcast %cst_18 : f32 to vector<4x128xf32>
    %35 = arith.select %33, %30, %34 : vector<4x128xi1>, vector<4x128xf32>
    %36 = arith.addf %26, %35 : vector<4x128xf32>
    %c2 = arith.constant 2 : index
    %c0_19 = arith.constant 0 : index
    %c0_20 = arith.constant 0 : index
    %c0_21 = arith.constant 0 : index
    %37 = vector.load %arg3[%c2, %c0_19, %c0_20, %c0_21] : memref<3x1x4x128xbf16, #tpu.memory_space<vmem>>, vector<1x1x4x128xbf16>
    %38 = vector.shape_cast %37 : vector<1x1x4x128xbf16> to vector<4x128xbf16>
    %39 = arith.extf %38 : vector<4x128xbf16> to vector<4x128xf32>
    %40 = math.absf %39 : vector<4x128xf32>
    %cst_22 = arith.constant 5.000000e-02 : f32
    %41 = vector.broadcast %cst_22 : f32 to vector<4x128xf32>
    %42 = arith.mulf %41, %40 : vector<4x128xf32>
    %43 = arith.cmpf olt, %15, %42 : vector<4x128xf32>
    %cst_23 = arith.constant 0.000000e+00 : f32
    %44 = vector.broadcast %cst_23 : f32 to vector<4x128xf32>
    %45 = arith.select %43, %40, %44 : vector<4x128xi1>, vector<4x128xf32>
    %46 = arith.addf %36, %45 : vector<4x128xf32>
    %cst_24 = arith.constant 3.33333325 : f32
    %47 = vector.broadcast %cst_24 : f32 to vector<4x128xf32>
    %48 = arith.mulf %46, %47 : vector<4x128xf32>
    %c0_25 = arith.constant 0 : index
    %c0_26 = arith.constant 0 : index
    %c0_27 = arith.constant 0 : index
    %49 = vector.load %arg4[%c0_25, %c0_26, %c0_27] : memref<1x4x128xf32, #tpu.memory_space<vmem>>, vector<1x4x128xf32>
    %50 = vector.shape_cast %49 : vector<1x4x128xf32> to vector<4x128xf32>
    %51 = vector.shape_cast %12 : vector<4x128xf32> to vector<1x4x128xf32>
    tpu.vector_store %arg4[%c0_25, %c0_26, %c0_27], %51 {strides = array<i32>} : memref<1x4x128xf32, #tpu.memory_space<vmem>>, vector<1x4x128xf32>,
    %52 = arith.truncf %48 : vector<4x128xf32> to vector<4x128xbf16>
    %c0_28 = arith.constant 0 : index
    %c0_29 = arith.constant 0 : index
    %c0_30 = arith.constant 0 : index
    %53 = vector.load %arg5[%c0_28, %c0_29, %c0_30] : memref<1x4x128xbf16, #tpu.memory_space<vmem>>, vector<1x4x128xbf16>
    %54 = vector.shape_cast %53 : vector<1x4x128xbf16> to vector<4x128xbf16>
    %55 = vector.shape_cast %52 : vector<4x128xbf16> to vector<1x4x128xbf16>
    tpu.vector_store %arg5[%c0_28, %c0_29, %c0_30], %55 {strides = array<i32>} : memref<1x4x128xbf16, #tpu.memory_space<vmem>>, vector<1x4x128xbf16>,
    %cst_31 = arith.constant 1.000000e+00 : f32
    %56 = vector.broadcast %cst_31 : f32 to vector<4x128xf32>
    %57 = arith.mulf %12, %56 : vector<4x128xf32>
    %58 = arith.subf %8, %57 : vector<4x128xf32>
    %c0_32 = arith.constant 0 : index
    %c0_33 = arith.constant 0 : index
    %59 = vector.load %arg6[%c0_32, %c0_33] : memref<4x128xf32, #tpu.memory_space<vmem>>, vector<4x128xf32>
    tpu.vector_store %arg6[%c0_32, %c0_33], %58 {strides = array<i32>} : memref<4x128xf32, #tpu.memory_space<vmem>>, vector<4x128xf32>,
    return
  }
  func.func @transform_0(%arg0: i32, %arg1: i32) -> (i32, i32, i32) {
    %c0_i32 = arith.constant 0 : i32
    %c0_i32_0 = arith.constant 0 : i32
    return %arg1, %arg0, %c0_i32 : i32, i32, i32
  }
  func.func @transform_1(%arg0: i32, %arg1: i32) -> (i32, i32, i32, i32) {
    %c0_i32 = arith.constant 0 : i32
    %c0_i32_0 = arith.constant 0 : i32
    %c0_i32_1 = arith.constant 0 : i32
    return %c0_i32, %arg1, %arg0, %c0_i32_0 : i32, i32, i32, i32
  }
  func.func @transform_2(%arg0: i32, %arg1: i32) -> (i32, i32, i32) {
    %c0_i32 = arith.constant 0 : i32
    %c0_i32_0 = arith.constant 0 : i32
    return %arg1, %arg0, %c0_i32 : i32, i32, i32
  }
  func.func @transform_3(%arg0: i32, %arg1: i32) -> (i32, i32, i32) {
    %c0_i32 = arith.constant 0 : i32
    %c0_i32_0 = arith.constant 0 : i32
    return %arg1, %arg0, %c0_i32 : i32, i32, i32
  }
}

</mosaic_0001>

<llo_original>
// kernel: tpu_custom_call.1
$region0: #{tpu_custom_call.1}
  #allocation0 [shape = 'u32[]', space=smem, size = 0x4, offset = 0x4, fixed_abs, tag = 'smem constant byte address 0x4 - core index']
  #allocation1 [shape = 'u32[144,128]{1,0:T(1,128)}', space=vmem, size = 0x12000, scoped, tag = 'internal scratch']
  #allocation2 [shape = 'f32[4,128]{1,0:T(4,128)}', space=vmem, size = 0x800, scoped, tag = 'scratch operand']
  %s0 = inlined_call_operand.hbm [shape: f32[4,4,128], index: 0, kind: input, shape index: {}]
  %s1 = inlined_call_operand.hbm [shape: bf16[3,4,4,128], index: 1, kind: input, shape index: {}]
  %s2 = inlined_call_operand.hbm [shape: f32[4,4,128], index: 2, kind: output, shape index: {0}]
  %s3 = inlined_call_operand.hbm [shape: bf16[4,4,128], index: 3, kind: output, shape index: {1}]
  %4 = xla_tuple %s2, %s3
  %s5 = sld [smem:[#allocation0]]
  $region61: #{tpu_custom_call.1} parent=0
    _
  %s7 = ssub.s32 1, %s5
  %s8 = scalar_select 0, %s7, %s5
  $region1: #{tpu_custom_call.1} parent=0
    #allocation3 [shape = 'u8[4096]{0}', space=vmem, size = 0x1000, scoped, tag = 'input window, operand 0']
    #allocation4 [shape = 's32[2]{0}', space=sflag, size = 0x8, scoped, tag = 'scoped memory for tpu_custom_call.1']
    #allocation5 [shape = 's32[2]{0}', space=sflag, size = 0x8, scoped, tag = 'scoped memory for tpu_custom_call.1']
    #allocation6 [shape = 'u8[6144]{0}', space=vmem, size = 0x1800, scoped, tag = 'input window, operand 1']
    #allocation7 [shape = 's32[2]{0}', space=sflag, size = 0x8, scoped, tag = 'scoped memory for tpu_custom_call.1']
    #allocation8 [shape = 'u8[4096]{0}', space=vmem, size = 0x1000, scoped, tag = 'output window, operand 0']
    #allocation9 [shape = 'u8[2048]{0}', space=vmem, size = 0x800, scoped, tag = 'output window, operand 1']
    #allocation10 [shape = 's32[2]{0}', space=sflag, size = 0x8, scoped, tag = 'scoped memory for tpu_custom_call.1']
    %9 = vsyncpa [#allocation4], 0
    %s10 = scalar_lea.sflag [#allocation4], 1
    %11 = vsyncpa %s10, 0
    %12 = vsyncpa [#allocation7], 0
    %s13 = scalar_lea.sflag [#allocation7], 1
    %14 = vsyncpa %s13, 0
    %15 = vsyncpa [#allocation5], 0
    %s16 = scalar_lea.sflag [#allocation5], 1
    %17 = vsyncpa %s16, 0
    %18 = vsyncpa [#allocation10], 0
    %s19 = scalar_lea.sflag [#allocation10], 1
    %20 = vsyncpa %s19, 0
    loop: start=0, step=1, limit=6
    $region2: #{tpu_custom_call.1} parent=1 // loop_pre_header
      _
    $region3: #{tpu_custom_call.1} parent=1 // loop_header
      %s22 = sphi 0, %s26
      %p23 = scmp.ge.s32.totalorder %s22, 6
      %s29 = sphi 0, %s41
      %s30 = sphi 0, %s37
      %s31 = sphi 0, %s29
      %s32 = sphi 0, %s30
      %s33 = sphi 0, %s31
      %s34 = sphi 0, %s32
      %s46 = sphi 0, %s48
      %s49 = sphi 0, %s46
      %s50 = sphi 0, %s49
      %s66 = sphi 0, %s50
      %s74 = sphi 0, %s76
      %s77 = sphi 0, %s74
      %s78 = sphi 0, %s77
      %s94 = sphi 0, %s78
      %s102 = sphi 0, %s104
      %s105 = sphi 0, %s102
      %s106 = sphi 0, %s105
      %s122 = sphi 0, %s106
      %s130 = sphi 0, %s132
      %s133 = sphi 0, %s130
      %s134 = sphi 0, %s133
      %s150 = sphi 0, %s134
    $region4: #{tpu_custom_call.1} parent=1 // loop_header_branch
      %25 = sbr.rel (%p23) target = $region8
    $region5: #{tpu_custom_call.1} parent=1 // loop_body
      %s27 = ssub.s32 %s22, 1
      %s28 = ssub.s32 %s22, 2
      %s35 = sadd.s32 1, %s30
      %p36 = scmp.ge.s32.totalorder %s35, 4
      %s37 = scalar_select %p36, 0, %s35
      %s38 = sadd.s32 1, %s29
      %s39 = scalar_select %p36, %s38, %s29
      %p40 = scmp.ge.s32.totalorder %s39, 1
      %s41 = scalar_select %p40, 0, %s39
      %s42 = ssub.s32 %s30, %s37
      %s43 = ssub.s32 %s29, %s41
      %s44 = sor.u32 %s42, %s43
      %p45 = scmp.eq.s32.totalorder %s44, 0
      %s47 = sadd.s32 %s46, 1
      %s48 = scalar_select %p45, %s46, %s47
      %p51 = pneg %p45
      %p52 = scmp.eq.s32.totalorder %s22, 3
      %p53 = por %p51, %p52
      %p54 = scmp.ne.s32.totalorder %s46, %s49
      %p55 = scmp.eq.s32.totalorder %s22, 0
      %p56 = por %p54, %p55
      %p57 = scmp.ne.s32.totalorder %s46, %s49
      %p58 = scmp.eq.s32.totalorder %s27, 3
      %p59 = por %p57, %p58
      %p60 = scmp.ne.s32.totalorder %s49, %s50
      %p61 = scmp.eq.s32.totalorder %s27, 0
      %p62 = por %p60, %p61
      %p63 = scmp.ne.s32.totalorder %s49, %s50
      %p64 = scmp.eq.s32.totalorder %s28, 3
      %p65 = por %p63, %p64
      %p67 = scmp.ne.s32.totalorder %s50, %s66
      %p68 = scmp.eq.s32.totalorder %s28, 0
      %p69 = por %p67, %p68
      %s70 = ssub.s32 %s30, %s37
      %s71 = ssub.s32 %s29, %s41
      %s72 = sor.u32 %s70, %s71
      %p73 = scmp.eq.s32.totalorder %s72, 0
      %s75 = sadd.s32 %s74, 1
      %s76 = scalar_select %p73, %s74, %s75
      %p79 = pneg %p73
      %p80 = scmp.eq.s32.totalorder %s22, 3
      %p81 = por %p79, %p80
      %p82 = scmp.ne.s32.totalorder %s74, %s77
      %p83 = scmp.eq.s32.totalorder %s22, 0
      %p84 = por %p82, %p83
      %p85 = scmp.ne.s32.totalorder %s74, %s77
      %p86 = scmp.eq.s32.totalorder %s27, 3
      %p87 = por %p85, %p86
      %p88 = scmp.ne.s32.totalorder %s77, %s78
      %p89 = scmp.eq.s32.totalorder %s27, 0
      %p90 = por %p88, %p89
      %p91 = scmp.ne.s32.totalorder %s77, %s78
      %p92 = scmp.eq.s32.totalorder %s28, 3
      %p93 = por %p91, %p92
      %p95 = scmp.ne.s32.totalorder %s78, %s94
      %p96 = scmp.eq.s32.totalorder %s28, 0
      %p97 = por %p95, %p96
      %s98 = ssub.s32 %s30, %s37
      %s99 = ssub.s32 %s29, %s41
      %s100 = sor.u32 %s98, %s99
      %p101 = scmp.eq.s32.totalorder %s100, 0
      %s103 = sadd.s32 %s102, 1
      %s104 = scalar_select %p101, %s102, %s103
      %p107 = pneg %p101
      %p108 = scmp.eq.s32.totalorder %s22, 3
      %p109 = por %p107, %p108
      %p110 = scmp.ne.s32.totalorder %s102, %s105
      %p111 = scmp.eq.s32.totalorder %s22, 0
      %p112 = por %p110, %p111
      %p113 = scmp.ne.s32.totalorder %s102, %s105
      %p114 = scmp.eq.s32.totalorder %s27, 3
      %p115 = por %p113, %p114
      %p116 = scmp.ne.s32.totalorder %s105, %s106
      %p117 = scmp.eq.s32.totalorder %s27, 0
      %p118 = por %p116, %p117
      %p119 = scmp.ne.s32.totalorder %s105, %s106
      %p120 = scmp.eq.s32.totalorder %s28, 3
      %p121 = por %p119, %p120
      %p123 = scmp.ne.s32.totalorder %s106, %s122
      %p124 = scmp.eq.s32.totalorder %s28, 0
      %p125 = por %p123, %p124
      %s126 = ssub.s32 %s30, %s37
      %s127 = ssub.s32 %s29, %s41
      %s128 = sor.u32 %s126, %s127
      %p129 = scmp.eq.s32.totalorder %s128, 0
      %s131 = sadd.s32 %s130, 1
      %s132 = scalar_select %p129, %s130, %s131
      %p135 = pneg %p129
      %p136 = scmp.eq.s32.totalorder %s22, 3
      %p137 = por %p135, %p136
      %p138 = scmp.ne.s32.totalorder %s130, %s133
      %p139 = scmp.eq.s32.totalorder %s22, 0
      %p140 = por %p138, %p139
      %p141 = scmp.ne.s32.totalorder %s130, %s133
      %p142 = scmp.eq.s32.totalorder %s27, 3
      %p143 = por %p141, %p142
      %p144 = scmp.ne.s32.totalorder %s133, %s134
      %p145 = scmp.eq.s32.totalorder %s27, 0
      %p146 = por %p144, %p145
      %p147 = scmp.ne.s32.totalorder %s133, %s134
      %p148 = scmp.eq.s32.totalorder %s28, 3
      %p149 = por %p147, %p148
      %p151 = scmp.ne.s32.totalorder %s134, %s150
      %p152 = scmp.eq.s32.totalorder %s28, 0
      %p153 = por %p151, %p152
      %p154 = scmp.le.s32.totalorder 1, %s22
      %p155 = scmp.lt.s32.totalorder %s22, 5
      %p156 = pnand %p154, %p155
      %p157 = pneg %p156
      // Predicated region
      $region9: #{tpu_custom_call.1} parent=5 // pred_check
        _
      $region10: #{tpu_custom_call.1} parent=5 // pred_check_branch
        %159 = sbr.rel (%p156) target = $region12
      $region11: #{tpu_custom_call.1} parent=5 // pred_region
        %s160 = ssub.s32 %s22, 1
      $region12: #{tpu_custom_call.1} parent=5 // pred_fallthru
        _
      %p161 = scmp.lt.s32.totalorder %s22, 4
      // Predicated region
      $region13: #{tpu_custom_call.1} parent=5 // pred_check
        %p162 = pneg %p161
      $region14: #{tpu_custom_call.1} parent=5 // pred_check_branch
        %164 = sbr.rel (%p162) target = $region16
      $region15: #{tpu_custom_call.1} parent=5 // pred_region
        // Predicated region
        $region17: #{tpu_custom_call.1} parent=15 // pred_check
          %p165 = pneg %p56
        $region18: #{tpu_custom_call.1} parent=15 // pred_check_branch
          %167 = sbr.rel (%p165) target = $region20
        $region19: #{tpu_custom_call.1} parent=15 // pred_region
          %s168 = sand.u32 %s46, 1
          %s169 = scalar_lea.sflag [#allocation4], %s168
          %s170 = sand.u32 %s46, 1
          %s171 = smul.addr %s170, 4
          %s172 = scalar_lea.vmem [#allocation3], %s171
          %s174 = ssub.s32 64, 64
          %175 = vsyncadd %s169, %s174
          %s176 = sadd.s32 %s29, %s30
          %s177 = smul.addr %s176, 64
          %s178 = scalar_lea.hbm %s0, %s177
          %s180 = sshll.u32 %s172, 4
          %s181 = int_to_ptr.vmem [resolvable:$true] %s180
          %183 = dma.hbm_to_vmem [thread:$0]  %s178, 64, %s181, %s169
        $region20: #{tpu_custom_call.1} parent=15 // pred_fallthru
          _
        // Predicated region
        $region21: #{tpu_custom_call.1} parent=15 // pred_check
          %p184 = pneg %p84
        $region22: #{tpu_custom_call.1} parent=15 // pred_check_branch
          %186 = sbr.rel (%p184) target = $region24
        $region23: #{tpu_custom_call.1} parent=15 // pred_region
          %s187 = sand.u32 %s74, 1
          %s188 = scalar_lea.sflag [#allocation7], %s187
          %s189 = sand.u32 %s74, 1
          %s190 = smul.addr %s189, 6
          %s191 = scalar_lea.vmem [#allocation6], %s190
          %s193 = ssub.s32 96, 96
          %194 = vsyncadd %s188, %s193
          %s195 = sadd.s32 %s29, %s30
          %s196 = smul.addr %s195, 32
          %s197 = scalar_lea.hbm %s1, %s196
          %s198 = sshll.u32 %s191, 4
          %s199 = int_to_ptr.vmem [resolvable:$true] %s198
          %204 = dma.hbm_to_vmem [thread:$0]  %s197, 96, %s199, %s188, 128, 32, 2
        $region24: #{tpu_custom_call.1} parent=15 // pred_fallthru
          _
      $region16: #{tpu_custom_call.1} parent=5 // pred_fallthru
        _
      %p205 = scmp.le.s32.totalorder 1, %s22
      %p206 = scmp.lt.s32.totalorder %s22, 5
      %p207 = pnand %p205, %p206
      %p208 = pneg %p207
      // Predicated region
      $region25: #{tpu_custom_call.1} parent=5 // pred_check
        _
      $region26: #{tpu_custom_call.1} parent=5 // pred_check_branch
        %210 = sbr.rel (%p207) target = $region28
      $region27: #{tpu_custom_call.1} parent=5 // pred_region
        %s211 = ssub.s32 %s22, 1
        %s212 = sand.u32 %s49, 1
        %s213 = scalar_lea.sflag [#allocation4], %s212
        %s214 = sand.u32 %s49, 1
        %s215 = smul.addr %s214, 4
        %s216 = scalar_lea.vmem [#allocation3], %s215
        // Predicated region
        $region29: #{tpu_custom_call.1} parent=27 // pred_check
          %p217 = pneg %p62
        $region30: #{tpu_custom_call.1} parent=27 // pred_check_branch
          %219 = sbr.rel (%p217) target = $region32
        $region31: #{tpu_custom_call.1} parent=27 // pred_region
          %220 = dma.done %s213, 64
        $region32: #{tpu_custom_call.1} parent=27 // pred_fallthru
          _
        %s221 = sand.u32 %s77, 1
        %s222 = scalar_lea.sflag [#allocation7], %s221
        %s223 = sand.u32 %s77, 1
        %s224 = smul.addr %s223, 6
        %s225 = scalar_lea.vmem [#allocation6], %s224
        // Predicated region
        $region33: #{tpu_custom_call.1} parent=27 // pred_check
          %p226 = pneg %p90
        $region34: #{tpu_custom_call.1} parent=27 // pred_check_branch
          %228 = sbr.rel (%p226) target = $region36
        $region35: #{tpu_custom_call.1} parent=27 // pred_region
          %229 = dma.done %s222, 96
        $region36: #{tpu_custom_call.1} parent=27 // pred_fallthru
          _
        %s230 = sand.u32 %s49, 1
        %s231 = scalar_lea.sflag [#allocation4], %s230
        %s232 = sand.u32 %s49, 1
        %s233 = smul.addr %s232, 4
        %s234 = scalar_lea.vmem [#allocation3], %s233
        %p235 = pneg %p62
        %p236 = pneg %p59
        %s237 = sand.u32 %s77, 1
        %s238 = scalar_lea.sflag [#allocation7], %s237
        %s239 = sand.u32 %s77, 1
        %s240 = smul.addr %s239, 6
        %s241 = scalar_lea.vmem [#allocation6], %s240
        %p242 = pneg %p90
        %p243 = pneg %p87
        %p244 = pneg %p118
        %p245 = pneg %p115
        %s246 = sand.u32 %s105, 1
        %s247 = scalar_lea.sflag [#allocation5], %s246
        %s248 = sand.u32 %s105, 1
        %s249 = smul.addr %s248, 4
        %s250 = scalar_lea.vmem [#allocation8], %s249
        %p251 = pneg %p146
        %p252 = pneg %p143
        %s253 = sand.u32 %s133, 1
        %s254 = scalar_lea.sflag [#allocation10], %s253
        %s255 = sand.u32 %s133, 1
        %s256 = smul.addr %s255, 2
        %s257 = scalar_lea.vmem [#allocation9], %s256
        %p258 = scmp.eq.s32.totalorder %s32, 0
        // Predicated region
        $region37: #{tpu_custom_call.1} parent=27 // pred_check
          %p259 = pneg %p258
        $region38: #{tpu_custom_call.1} parent=27 // pred_check_branch
          %261 = sbr.rel (%p259) target = $region40
        $region39: #{tpu_custom_call.1} parent=27 // pred_region
          %262 = vst [vmem:[#allocation2] sm:$0xf] 0.0
        $region40: #{tpu_custom_call.1} parent=27 // pred_fallthru
          _
        %v263 = vld [vmem:[%s216] sm:$0xf]
        %v264 = vld [vmem:[#allocation2] sm:$0xf]
        %v265 = vmul.f32 %v264, 0.5
        %v266 = vadd.f32 %v265, %v263
        %vm267 = vcmp.gt.f32.partialorder %v266, 1.0
        %v268 = vsel %vm267, 1, 0
        %v269 = vcvt.s32.f32 %v268
        %v270 = vsub.f32 %v266, 1.0
        %v271 = vand.u32 2147483647, %v270
        %v272 = vld [vmem:[%s225] sm:$0x3]
        %v273 = vunpack.c.l.bf16 %v272
        %v274 = vand.u32 2147483647, %v273
        %v275 = vmul.f32 %v274, 0.05
        %vm276 = vcmp.lt.f32.partialorder %v271, %v275
        %v277 = vsel %vm276, %v274, 0.0
        %v278 = vadd.f32 %v277, 0.0
        %s279 = scalar_lea.vmem %s225, 2 [#allocation6]
        %v280 = vld [vmem:[%s279] sm:$0x3]
        %v281 = vunpack.c.l.bf16 %v280
        %v282 = vand.u32 2147483647, %v281
        %v283 = vmul.f32 %v282, 0.05
        %vm284 = vcmp.lt.f32.partialorder %v271, %v283
        %v285 = vsel %vm284, %v282, 0.0
        %v286 = vadd.f32 %v278, %v285
        %s287 = scalar_lea.vmem %s225, 4 [#allocation6]
        %v288 = vld [vmem:[%s287] sm:$0x3]
        %v289 = vunpack.c.l.bf16 %v288
        %v290 = vand.u32 2147483647, %v289
        %v291 = vmul.f32 %v290, 0.05
        %vm292 = vcmp.lt.f32.partialorder %v271, %v291
        %v293 = vsel %vm292, %v290, 0.0
        %v294 = vadd.f32 %v286, %v293
        %v295 = vmul.f32 %v294, 3.3333333
        %296 = vst [vmem:[%s250] sm:$0xf] %v269
        %v297 = vpack.c.bf16 %v295, %v295
        %298 = vst [vmem:[%s257] sm:$0x3] %v297
        %v299 = vsub.f32 %v266, %v269
        %300 = vst [vmem:[#allocation2] sm:$0xf] %v299
        %s301 = sand.u32 %s105, 1
        %s302 = scalar_lea.sflag [#allocation5], %s301
        %s303 = sand.u32 %s105, 1
        %s304 = smul.addr %s303, 4
        %s305 = scalar_lea.vmem [#allocation8], %s304
        %s306 = sand.u32 %s133, 1
        %s307 = scalar_lea.sflag [#allocation10], %s306
        %s308 = sand.u32 %s133, 1
        %s309 = smul.addr %s308, 2
        %s310 = scalar_lea.vmem [#allocation9], %s309
        // Predicated region
        $region41: #{tpu_custom_call.1} parent=27 // pred_check
          %p311 = pneg %p115
        $region42: #{tpu_custom_call.1} parent=27 // pred_check_branch
          %313 = sbr.rel (%p311) target = $region44
        $region43: #{tpu_custom_call.1} parent=27 // pred_region
          %s315 = ssub.s32 64, 64
          %316 = vsyncadd %s302, %s315
          %s317 = sadd.s32 %s31, %s32
          %s318 = smul.addr %s317, 64
          %s319 = scalar_lea.hbm %s2, %s318
          %s321 = sshll.u32 %s305, 4
          %s322 = int_to_ptr.vmem [resolvable:$true] %s321
          %324 = dma.vmem_to_hbm [thread:$0]  %s322, 64, %s319, %s302
        $region44: #{tpu_custom_call.1} parent=27 // pred_fallthru
          _
        // Predicated region
        $region45: #{tpu_custom_call.1} parent=27 // pred_check
          %p325 = pneg %p143
        $region46: #{tpu_custom_call.1} parent=27 // pred_check_branch
          %327 = sbr.rel (%p325) target = $region48
        $region47: #{tpu_custom_call.1} parent=27 // pred_region
          %s329 = ssub.s32 32, 32
          %330 = vsyncadd %s307, %s329
          %s331 = sadd.s32 %s31, %s32
          %s332 = smul.addr %s331, 32
          %s333 = scalar_lea.hbm %s3, %s332
          %s335 = sshll.u32 %s310, 4
          %s336 = int_to_ptr.vmem [resolvable:$true] %s335
          %338 = dma.vmem_to_hbm [thread:$0]  %s336, 32, %s333, %s307
        $region48: #{tpu_custom_call.1} parent=27 // pred_fallthru
          _
      $region28: #{tpu_custom_call.1} parent=5 // pred_fallthru
        _
      %p339 = scmp.le.s32.totalorder 2, %s22
      // Predicated region
      $region49: #{tpu_custom_call.1} parent=5 // pred_check
        %p340 = pneg %p339
      $region50: #{tpu_custom_call.1} parent=5 // pred_check_branch
        %342 = sbr.rel (%p340) target = $region52
      $region51: #{tpu_custom_call.1} parent=5 // pred_region
        %s343 = ssub.s32 %s22, 2
        // Predicated region
        $region53: #{tpu_custom_call.1} parent=51 // pred_check
          %p344 = pneg %p121
        $region54: #{tpu_custom_call.1} parent=51 // pred_check_branch
          %346 = sbr.rel (%p344) target = $region56
        $region55: #{tpu_custom_call.1} parent=51 // pred_region
          %s347 = sand.u32 %s106, 1
          %s348 = scalar_lea.sflag [#allocation5], %s347
          %s349 = sand.u32 %s106, 1
          %s350 = smul.addr %s349, 4
          %s351 = scalar_lea.vmem [#allocation8], %s350
          %352 = dma.done %s348, 64
        $region56: #{tpu_custom_call.1} parent=51 // pred_fallthru
          _
        // Predicated region
        $region57: #{tpu_custom_call.1} parent=51 // pred_check
          %p353 = pneg %p149
        $region58: #{tpu_custom_call.1} parent=51 // pred_check_branch
          %355 = sbr.rel (%p353) target = $region60
        $region59: #{tpu_custom_call.1} parent=51 // pred_region
          %s356 = sand.u32 %s134, 1
          %s357 = scalar_lea.sflag [#allocation10], %s356
          %s358 = sand.u32 %s134, 1
          %s359 = smul.addr %s358, 2
          %s360 = scalar_lea.vmem [#allocation9], %s359
          %361 = dma.done %s357, 32
        $region60: #{tpu_custom_call.1} parent=51 // pred_fallthru
          _
      $region52: #{tpu_custom_call.1} parent=5 // pred_fallthru
        _
    $region6: #{tpu_custom_call.1} parent=1 // loop_footer
      %s26 = sadd.s32 1, %s22
    $region7: #{tpu_custom_call.1} parent=1 // loop_footer_branch
      %21 = sbr.rel target = $region3
    $region8: #{tpu_custom_call.1} parent=1 // loop_exit
      _
    %362 = vsyncpa [#allocation4], 1
    %s363 = scalar_lea.sflag [#allocation4], 1
    %364 = vsyncpa %s363, 1
    %365 = vsyncpa [#allocation7], 1
    %s366 = scalar_lea.sflag [#allocation7], 1
    %367 = vsyncpa %s366, 1
    %368 = vsyncpa [#allocation5], 1
    %s369 = scalar_lea.sflag [#allocation5], 1
    %370 = vsyncpa %s369, 1
    %371 = vsyncpa [#allocation10], 1
    %s372 = scalar_lea.sflag [#allocation10], 1
    %373 = vsyncpa %s372, 1

</llo_original>
